<compile_context>
chip_gen: v6e
topology: v6e:2x2x1
jax: 0.10.0
libtpu: 0.0.40
codegen_flags: <defaults>
</compile_context>

<pallas_src>
import numpy as np

import jax
import jax.numpy as jnp
from jax import lax
from jax.experimental import pallas as pl
from jax.experimental.pallas import tpu as pltpu

EPS = 1e-5  # torch.nn.LayerNorm default


# --------------------------------------------------------------------------- #
# Kernels
# --------------------------------------------------------------------------- #
def _layer_norm_f32(r, gamma, beta):
    """LayerNorm over the last dim (biased variance, matches torch.nn.LayerNorm)."""
    mean = jnp.mean(r, axis=-1, keepdims=True)
    cent = r - mean
    var = jnp.mean(cent * cent, axis=-1, keepdims=True)
    return cent * lax.rsqrt(var + EPS) * gamma.astype(jnp.float32) + beta.astype(jnp.float32)


def ffn_resident_kernel(x_ref, w1_ref, b1_ref, w2_ref, b2_ref, g_ref, be_ref, o_ref):
    """Whole hidden dim in one step.  Weight BlockSpecs have constant index_maps,
    so W1^T / W2^T are DMA'd once and stay VMEM-resident across row tiles.
    No accumulator scratch needed."""
    x = x_ref[...]
    h = jnp.dot(x.astype(w1_ref.dtype), w1_ref[...],
                preferred_element_type=jnp.float32)
    h = jnp.maximum(h + b1_ref[...].astype(jnp.float32), 0.0)

    # TODO(synk): nn.Dropout implemented as identity (eval/inference mode);
    # train-mode stochastic dropout would use pltpu.prng_seed + prng_random_bits.

    y = jnp.dot(h.astype(w2_ref.dtype), w2_ref[...],
                preferred_element_type=jnp.float32)
    r = x.astype(jnp.float32) + y + b2_ref[...].astype(jnp.float32)   # residual in f32
    o_ref[...] = _layer_norm_f32(r, g_ref[...], be_ref[...]).astype(o_ref.dtype)


def ffn_stream_kernel(x_ref, w1_ref, b1_ref, w2_ref, b2_ref, g_ref, be_ref,
                      o_ref, acc_ref):
    """Fallback: hidden dim tiled as an inner 'arbitrary' reduction axis with an
    f32 VMEM accumulator (pl.when init/finalize).  Per-chunk ReLU before
    accumulation is exact (each hidden unit lives in exactly one chunk)."""
    k = pl.program_id(1)

    @pl.when(k == 0)
    def _():
        acc_ref[...] = jnp.zeros_like(acc_ref)

    x = x_ref[...]
    h = jnp.dot(x.astype(w1_ref.dtype), w1_ref[...],
                preferred_element_type=jnp.float32)
    h = jnp.maximum(h + b1_ref[...].astype(jnp.float32), 0.0)
    # TODO(synk): dropout identity (eval mode), as above.
    acc_ref[...] += jnp.dot(h.astype(w2_ref.dtype), w2_ref[...],
                            preferred_element_type=jnp.float32)

    @pl.when(k == pl.num_programs(1) - 1)
    def _():
        r = x.astype(jnp.float32) + acc_ref[...] + b2_ref[...].astype(jnp.float32)
        o_ref[...] = _layer_norm_f32(r, g_ref[...], be_ref[...]).astype(o_ref.dtype)


# --------------------------------------------------------------------------- #
# Tiling / VMEM planning helpers
# --------------------------------------------------------------------------- #
def _round_up(n, m):
    return ((n + m - 1) // m) * m


def _cdiv(a, b):
    return -(-a // b)


def _vmem_budget_bytes():
    """Per-core VMEM we allow the kernel to request (with ~20% headroom for
    compiler internal scratch, semaphores, spilled temporaries)."""
    cap = 64 << 20  # conservative fallback = v7x per-TC VMEM
    try:
        info = pltpu.get_tpu_info()
        cap = int(getattr(info, "vmem_capacity_bytes", cap)) or cap
    except Exception:
        pass
    return int(cap * 0.8)


def _pick_row_tile(R, tm_max):
    """Multiple-of-8 row tile <= tm_max.  Prefer >= 2 row tiles (so both v7x
    TensorCores get work), then small padding waste (<= ~12.5%), then the
    largest tile (MXU M-fill / per-step overhead)."""
    cap = max(8, min(_round_up(R, 8), _round_up(tm_max, 8)))
    cands = sorted({c for c in (8, 16, 32, 64, 128, 192, 256, 384, 512, 768, 1024)
                    if c <= cap} | {cap})
    multi = [t for t in cands if _cdiv(R, t) >= 2] or cands
    ok = [t for t in multi if _cdiv(R, t) * t - R <= max(R // 8, 7)]
    if ok:
        return max(ok)
    return min(multi, key=lambda t: (_cdiv(R, t) * t, -t))


def _pick_reduction_tile(h, preferred=512, align=256):
    """Largest multiple of `align` <= preferred dividing h (256-aligned first to
    fill the 256x256 MXU); relax to 128; else full h."""
    for a in (align, 128):
        t = (min(preferred, h) // a) * a
        while t >= a:
            if h % t == 0:
                return t
            t -= a
    return h


def _resident_footprint(tm, E, H, xsz, osz, wsz):
    return (2 * tm * E * xsz            # x tile (double-buffered)
            + 2 * tm * E * osz          # out tile (double-buffered)
            + 2 * E * H * wsz           # W1^T (budgeted at 2 buffers)
            + 2 * H * E * wsz           # W2^T (budgeted at 2 buffers)
            + 2 * (H + 3 * E) * 4       # b1, b2, gamma, beta
            + tm * H * 4                # f32 hidden intermediate
            + 2 * tm * E * 4)           # f32 residual / LN temporaries


def _stream_footprint(tm, tk, E, H, xsz, osz, wsz):
    del H
    return (2 * tm * E * xsz + 2 * tm * E * osz
            + 2 * E * tk * wsz + 2 * tk * E * wsz   # weight chunks (2 buffers)
            + 2 * (tk + 3 * E) * 4                  # b1 chunk, b2, gamma, beta
            + tm * E * 4                            # f32 accumulator scratch
            + tm * tk * 4)                          # f32 hidden intermediate


# --------------------------------------------------------------------------- #
# Wrappers
# --------------------------------------------------------------------------- #
def prepare_ffn_params(w1, b1, w2, b2, gamma, beta, *, matmul_dtype=jnp.bfloat16):
    """One-time weight repack (transpose + cast).  Call once, outside the hot
    loop, so repeated layer application does not re-materialize transposed
    copies in HBM on every call.  PyTorch convention: w1 (H, E), w2 (E, H)."""
    H, E = w1.shape
    w_dtype = matmul_dtype if matmul_dtype is not None else w1.dtype
    return dict(
        w1t=jnp.asarray(w1).T.astype(w_dtype),            # (E, H)
        w2t=jnp.asarray(w2).T.astype(w_dtype),             # (H, E)
        b1=jnp.asarray(b1).reshape(1, H).astype(jnp.float32),
        b2=jnp.asarray(b2).reshape(1, E).astype(jnp.float32),
        gamma=jnp.asarray(gamma).reshape(1, E).astype(jnp.float32),
        beta=jnp.asarray(beta).reshape(1, E).astype(jnp.float32),
    )


def ffn_block_prepacked(x, params, *, tm=None, tk_h=None, force_stream=False):
    """x: (B, S, E); params from prepare_ffn_params."""
    B, S, E = x.shape
    w1t, w2t = params["w1t"], params["w2t"]
    H = w1t.shape[1]
    R = B * S

    xsz = np.dtype(x.dtype).itemsize
    osz = xsz
    wsz = np.dtype(w1t.dtype).itemsize
    budget = _vmem_budget_bytes()

    # --- Path selection: keep both weight matrices VMEM-resident when they fit.
    tm_res = _pick_row_tile(R, tm if tm is not None else 256)
    resident_fp = _resident_footprint(tm_res, E, H, xsz, osz, wsz)
    resident = (not force_stream) and (resident_fp <= budget)

    if resident:
        tm_eff, tk, n_k = tm_res, H, 1
        footprint = resident_fp
    else:
        tk = tk_h if tk_h is not None else _pick_reduction_tile(H)
        assert H % tk == 0, "hidden dim must be divisible by the reduction tile"
        n_k = H // tk
        # Weight chunks are re-streamed per row tile in this path -> make rows
        # tall enough that AI (~2*tm/wsz flop/B) clears the HBM roofline.
        tm_eff = _pick_row_tile(R, tm if tm is not None else 1024)
        while tm_eff > 8 and _stream_footprint(tm_eff, tk, E, H, xsz, osz, wsz) > budget:
            tm_eff = max(8, _round_up(tm_eff // 2, 8))
        footprint = _stream_footprint(tm_eff, tk, E, H, xsz, osz, wsz)

    R_pad = _round_up(R, tm_eff)
    n_rows = R_pad // tm_eff

    x2d = x.reshape(R, E)
    if R_pad != R:
        # Padded rows are zeros; they flow through ReLU/residual/LayerNorm
        # (wasted work only) and are sliced away below -- not a correctness issue.
        x2d = jnp.pad(x2d, ((0, R_pad - R), (0, 0)))

    vmem_limit = int(min(budget, max(32 << 20, int(1.25 * footprint) + (4 << 20))))

    weight_bytes = 2 * E * H * wsz
    streamed_weight_bytes = weight_bytes if resident else n_rows * weight_bytes
    cost = pl.CostEstimate(
        flops=4 * R_pad * E * H,
        transcendentals=R_pad,
        bytes_accessed=(R_pad * E * (xsz + osz) + streamed_weight_bytes
                        + (H + 3 * E) * 4),
    )

    args = (x2d, w1t, params["b1"], w2t, params["b2"], params["gamma"], params["beta"])

    if resident:
        out = pl.pallas_call(
            ffn_resident_kernel,
            out_shape=jax.ShapeDtypeStruct((R_pad, E), x.dtype),
            grid_spec=pltpu.PrefetchScalarGridSpec(
                num_scalar_prefetch=0,
                grid=(n_rows,),
                in_specs=[
                    pl.BlockSpec((tm_eff, E), lambda i: (i, 0)),   # x rows
                    pl.BlockSpec((E, H), lambda i: (0, 0)),        # W1^T (resident)
                    pl.BlockSpec((1, H), lambda i: (0, 0)),        # b1
                    pl.BlockSpec((H, E), lambda i: (0, 0)),        # W2^T (resident)
                    pl.BlockSpec((1, E), lambda i: (0, 0)),        # b2
                    pl.BlockSpec((1, E), lambda i: (0, 0)),        # gamma
                    pl.BlockSpec((1, E), lambda i: (0, 0)),        # beta
                ],
                out_specs=pl.BlockSpec((tm_eff, E), lambda i: (i, 0)),
            ),
            compiler_params=pltpu.CompilerParams(
                dimension_semantics=("parallel",),
                vmem_limit_bytes=vmem_limit,
            ),
            cost_estimate=cost,
        )(*args)
    else:
        out = pl.pallas_call(
            ffn_stream_kernel,
            out_shape=jax.ShapeDtypeStruct((R_pad, E), x.dtype),
            grid_spec=pltpu.PrefetchScalarGridSpec(
                num_scalar_prefetch=0,
                grid=(n_rows, n_k),
                in_specs=[
                    pl.BlockSpec((tm_eff, E), lambda i, k: (i, 0)),   # x rows
                    pl.BlockSpec((E, tk), lambda i, k: (0, k)),       # W1^T chunk
                    pl.BlockSpec((1, tk), lambda i, k: (0, k)),       # b1 chunk
                    pl.BlockSpec((tk, E), lambda i, k: (k, 0)),       # W2^T chunk
                    pl.BlockSpec((1, E), lambda i, k: (0, 0)),        # b2
                    pl.BlockSpec((1, E), lambda i, k: (0, 0)),        # gamma
                    pl.BlockSpec((1, E), lambda i, k: (0, 0)),        # beta
                ],
                out_specs=pl.BlockSpec((tm_eff, E), lambda i, k: (i, 0)),
                scratch_shapes=[pltpu.VMEM((tm_eff, E), jnp.float32)],
            ),
            compiler_params=pltpu.CompilerParams(
                dimension_semantics=("parallel", "arbitrary"),
                vmem_limit_bytes=vmem_limit,
            ),
            cost_estimate=cost,
        )(*args)

    return out[:R].reshape(B, S, E)


def ffn_block(x, w1, b1, w2, b2, gamma, beta, *, tm=None, tk_h=None,
              matmul_dtype=jnp.bfloat16):
    """Convenience wrapper (PyTorch weight convention: w1 (H,E), w2 (E,H)).
    For repeated layer application, call prepare_ffn_params once and use
    ffn_block_prepacked directly."""
    params = prepare_ffn_params(w1, b1, w2, b2, gamma, beta, matmul_dtype=matmul_dtype)
    return ffn_block_prepacked(x, params, tm=tm, tk_h=tk_h)


def reference(x, w1, b1, w2, b2, gamma, beta):
    h = jnp.maximum(x @ w1.T + b1, 0.0)
    y = h @ w2.T + b2
    r = x + y
    mean = jnp.mean(r, axis=-1, keepdims=True)
    var = jnp.mean((r - mean) ** 2, axis=-1, keepdims=True)
    return (r - mean) / jnp.sqrt(var + EPS) * gamma + beta


if __name__ == "__main__":
    B, S, E, H = 2, 8, 128, 256   # batch=2, seq=8, embed=128, hidden=256

    key = jax.random.PRNGKey(0)
    kx, k1, k2, k3, k4 = jax.random.split(key, 5)

    x = jax.random.normal(kx, (B, S, E), dtype=jnp.float32)

    # Deterministic parameter init (shapes follow nn.Linear / nn.LayerNorm).
    w1 = jax.random.normal(k1, (H, E), dtype=jnp.float32) * (1.0 / jnp.sqrt(E))
    b1 = jax.random.normal(k2, (H,), dtype=jnp.float32) * 0.01
    w2 = jax.random.normal(k3, (E, H), dtype=jnp.float32) * (1.0 / jnp.sqrt(H))
    b2 = jax.random.normal(k4, (E,), dtype=jnp.float32) * 0.01
    gamma = jnp.ones((E,), dtype=jnp.float32)
    beta = jnp.zeros((E,), dtype=jnp.float32)

    ref = reference(x, w1, b1, w2, b2, gamma, beta)

    # Default path: bf16 matmul operands (full-rate MXU), f32 residual/LayerNorm.
    out_bf16 = jax.block_until_ready(ffn_block(x, w1, b1, w2, b2, gamma, beta))
    assert out_bf16.shape == (B, S, E)
    assert jnp.allclose(out_bf16, ref, atol=5e-2, rtol=5e-2)

    # Full-precision path: strict tolerance against the f32 reference.
    out_f32 = jax.block_until_ready(
        ffn_block(x, w1, b1, w2, b2, gamma, beta, matmul_dtype=jnp.float32))
    assert jnp.allclose(out_f32, ref, atol=2e-4, rtol=2e-4)

    # Exercise the streaming (hidden-dim-tiled) fallback path as well.
    params_f32 = prepare_ffn_params(w1, b1, w2, b2, gamma, beta,
                                    matmul_dtype=jnp.float32)
    out_stream = jax.block_until_ready(
        ffn_block_prepacked(x, params_f32, tk_h=128, force_stream=True))
    assert jnp.allclose(out_stream, ref, atol=2e-4, rtol=2e-4)

    print("KERNEL_OK")
</pallas_src>

<mosaic_0001>
module attributes {stable_mosaic.version = 11 : i64} {
  func.func @ffn_resident_kernel(%arg0: i32, %arg1: memref<8x128xf32, #tpu.memory_space<vmem>>, %arg2: memref<128x256xbf16, #tpu.memory_space<vmem>>, %arg3: memref<1x256xf32, #tpu.memory_space<vmem>>, %arg4: memref<256x128xbf16, #tpu.memory_space<vmem>>, %arg5: memref<1x128xf32, #tpu.memory_space<vmem>>, %arg6: memref<1x128xf32, #tpu.memory_space<vmem>>, %arg7: memref<1x128xf32, #tpu.memory_space<vmem>>, %arg8: memref<8x128xf32, #tpu.memory_space<vmem>>) attributes {dimension_semantics = [#tpu.dimension_semantics<parallel>], iteration_bounds = array<i64: 2>, scalar_prefetch = 0 : i64, scratch_operands = 0 : i64, tpu.core_type = #tpu.core_type<tc>, window_params = [{transform_indices = @transform_0, window_bounds = array<i64: 8, 128>}, {pipeline_mode = #tpu.pipeline_mode<synchronous>, transform_indices = @transform_1, window_bounds = array<i64: 128, 256>}, {pipeline_mode = #tpu.pipeline_mode<synchronous>, transform_indices = @transform_2, window_bounds = array<i64: 1, 256>}, {pipeline_mode = #tpu.pipeline_mode<synchronous>, transform_indices = @transform_3, window_bounds = array<i64: 256, 128>}, {pipeline_mode = #tpu.pipeline_mode<synchronous>, transform_indices = @transform_4, window_bounds = array<i64: 1, 128>}, {pipeline_mode = #tpu.pipeline_mode<synchronous>, transform_indices = @transform_5, window_bounds = array<i64: 1, 128>}, {pipeline_mode = #tpu.pipeline_mode<synchronous>, transform_indices = @transform_6, window_bounds = array<i64: 1, 128>}, {transform_indices = @transform_7, window_bounds = array<i64: 8, 128>}]} {
    %c0 = arith.constant 0 : index
    %c0_0 = arith.constant 0 : index
    %0 = vector.load %arg1[%c0, %c0_0] : memref<8x128xf32, #tpu.memory_space<vmem>>, vector<8x128xf32>
    %1 = arith.truncf %0 : vector<8x128xf32> to vector<8x128xbf16>
    %c0_1 = arith.constant 0 : index
    %c0_2 = arith.constant 0 : index
    %2 = vector.load %arg2[%c0_1, %c0_2] : memref<128x256xbf16, #tpu.memory_space<vmem>>, vector<128x256xbf16>
    %cst = arith.constant dense<0.000000e+00> : vector<8x256xf32>
    %3 = tpu.matmul %1, %2, %cst {dimension_numbers = #tpu.dot_dimension_numbers<[1], [0], [0], [1], [0, 0, 1, 1], [], []>} : vector<8x128xbf16>, vector<128x256xbf16>, vector<8x256xf32> -> vector<8x256xf32>
    %c0_3 = arith.constant 0 : index
    %c0_4 = arith.constant 0 : index
    %4 = vector.load %arg3[%c0_3, %c0_4] : memref<1x256xf32, #tpu.memory_space<vmem>>, vector<1x256xf32>
    %5 = vector.broadcast %4 : vector<1x256xf32> to vector<8x256xf32>
    %6 = arith.addf %3, %5 : vector<8x256xf32>
    %cst_5 = arith.constant 0.000000e+00 : f32
    %7 = vector.broadcast %cst_5 : f32 to vector<8x256xf32>
    %8 = arith.maximumf %6, %7 : vector<8x256xf32>
    %9 = arith.truncf %8 : vector<8x256xf32> to vector<8x256xbf16>
    %c0_6 = arith.constant 0 : index
    %c0_7 = arith.constant 0 : index
    %10 = vector.load %arg4[%c0_6, %c0_7] : memref<256x128xbf16, #tpu.memory_space<vmem>>, vector<256x128xbf16>
    %cst_8 = arith.constant dense<0.000000e+00> : vector<8x128xf32>
    %11 = tpu.matmul %9, %10, %cst_8 {dimension_numbers = #tpu.dot_dimension_numbers<[1], [0], [0], [1], [0, 0, 1, 1], [], []>} : vector<8x256xbf16>, vector<256x128xbf16>, vector<8x128xf32> -> vector<8x128xf32>
    %12 = arith.addf %0, %11 : vector<8x128xf32>
    %c0_9 = arith.constant 0 : index
    %c0_10 = arith.constant 0 : index
    %13 = vector.load %arg5[%c0_9, %c0_10] : memref<1x128xf32, #tpu.memory_space<vmem>>, vector<1x128xf32>
    %14 = vector.broadcast %13 : vector<1x128xf32> to vector<8x128xf32>
    %15 = arith.addf %12, %14 : vector<8x128xf32>
    %c0_11 = arith.constant 0 : index
    %c0_12 = arith.constant 0 : index
    %16 = vector.load %arg6[%c0_11, %c0_12] : memref<1x128xf32, #tpu.memory_space<vmem>>, vector<1x128xf32>
    %c0_13 = arith.constant 0 : index
    %c0_14 = arith.constant 0 : index
    %17 = vector.load %arg7[%c0_13, %c0_14] : memref<1x128xf32, #tpu.memory_space<vmem>>, vector<1x128xf32>
    %cst_15 = arith.constant dense<0.000000e+00> : vector<8xf32>
    %18 = vector.multi_reduction <add>, %15, %cst_15 [1] : vector<8x128xf32> to vector<8xf32>
    %19 = vector.shape_cast %18 : vector<8xf32> to vector<8x1xf32>
    %cst_16 = arith.constant 1.280000e+02 : f32
    %20 = vector.broadcast %cst_16 : f32 to vector<8x1xf32>
    %21 = arith.divf %19, %20 : vector<8x1xf32>
    %22 = vector.broadcast %21 : vector<8x1xf32> to vector<8x128xf32>
    %23 = arith.subf %15, %22 : vector<8x128xf32>
    %24 = arith.mulf %23, %23 : vector<8x128xf32>
    %cst_17 = arith.constant dense<0.000000e+00> : vector<8xf32>
    %25 = vector.multi_reduction <add>, %24, %cst_17 [1] : vector<8x128xf32> to vector<8xf32>
    %26 = vector.shape_cast %25 : vector<8xf32> to vector<8x1xf32>
    %cst_18 = arith.constant 1.280000e+02 : f32
    %27 = vector.broadcast %cst_18 : f32 to vector<8x1xf32>
    %28 = arith.divf %26, %27 : vector<8x1xf32>
    %cst_19 = arith.constant 9.99999974E-6 : f32
    %29 = vector.broadcast %cst_19 : f32 to vector<8x1xf32>
    %30 = arith.addf %28, %29 : vector<8x1xf32>
    %31 = math.rsqrt %30 : vector<8x1xf32>
    %32 = vector.broadcast %31 : vector<8x1xf32> to vector<8x128xf32>
    %33 = arith.mulf %23, %32 : vector<8x128xf32>
    %34 = vector.broadcast %16 : vector<1x128xf32> to vector<8x128xf32>
    %35 = arith.mulf %33, %34 : vector<8x128xf32>
    %36 = vector.broadcast %17 : vector<1x128xf32> to vector<8x128xf32>
    %37 = arith.addf %35, %36 : vector<8x128xf32>
    %c0_20 = arith.constant 0 : index
    %c0_21 = arith.constant 0 : index
    %38 = vector.load %arg8[%c0_20, %c0_21] : memref<8x128xf32, #tpu.memory_space<vmem>>, vector<8x128xf32>
    tpu.vector_store %arg8[%c0_20, %c0_21], %37 {strides = array<i32>} : memref<8x128xf32, #tpu.memory_space<vmem>>, vector<8x128xf32>,
    return
  }
  func.func @transform_0(%arg0: i32) -> (i32, i32) {
    %c0_i32 = arith.constant 0 : i32
    %c0_i32_0 = arith.constant 0 : i32
    return %arg0, %c0_i32 : i32, i32
  }
  func.func @transform_1(%arg0: i32) -> (i32, i32) {
    %c0_i32 = arith.constant 0 : i32
    %c0_i32_0 = arith.constant 0 : i32
    %c0_i32_1 = arith.constant 0 : i32
    return %c0_i32, %c0_i32_0 : i32, i32
  }
  func.func @transform_2(%arg0: i32) -> (i32, i32) {
    %c0_i32 = arith.constant 0 : i32
    %c0_i32_0 = arith.constant 0 : i32
    %c0_i32_1 = arith.constant 0 : i32
    return %c0_i32, %c0_i32_0 : i32, i32
  }
  func.func @transform_3(%arg0: i32) -> (i32, i32) {
    %c0_i32 = arith.constant 0 : i32
    %c0_i32_0 = arith.constant 0 : i32
    %c0_i32_1 = arith.constant 0 : i32
    return %c0_i32, %c0_i32_0 : i32, i32
  }
  func.func @transform_4(%arg0: i32) -> (i32, i32) {
    %c0_i32 = arith.constant 0 : i32
    %c0_i32_0 = arith.constant 0 : i32
    %c0_i32_1 = arith.constant 0 : i32
    return %c0_i32, %c0_i32_0 : i32, i32
  }
  func.func @transform_5(%arg0: i32) -> (i32, i32) {
    %c0_i32 = arith.constant 0 : i32
    %c0_i32_0 = arith.constant 0 : i32
    %c0_i32_1 = arith.constant 0 : i32
    return %c0_i32, %c0_i32_0 : i32, i32
  }
  func.func @transform_6(%arg0: i32) -> (i32, i32) {
    %c0_i32 = arith.constant 0 : i32
    %c0_i32_0 = arith.constant 0 : i32
    %c0_i32_1 = arith.constant 0 : i32
    return %c0_i32, %c0_i32_0 : i32, i32
  }
  func.func @transform_7(%arg0: i32) -> (i32, i32) {
    %c0_i32 = arith.constant 0 : i32
    %c0_i32_0 = arith.constant 0 : i32
    return %arg0, %c0_i32 : i32, i32
  }
}

</mosaic_0001>

<llo_original>
// kernel: tpu_custom_call.1
$region0: #{tpu_custom_call.1}
  #allocation0 [shape = 'u32[]', space=smem, size = 0x4, offset = 0x4, fixed_abs, tag = 'smem constant byte address 0x4 - core index']
  #allocation1 [shape = 'u32[144,128]{1,0:T(1,128)}', space=vmem, size = 0x12000, scoped, tag = 'internal scratch']
  %s0 = inlined_call_operand.hbm [shape: f32[16,128], index: 0, kind: input, shape index: {}]
  %s1 = inlined_call_operand.hbm [shape: bf16[128,256], index: 1, kind: input, shape index: {}]
  %s2 = inlined_call_operand.vmem [shape: f32[1,256], index: 2, kind: input, shape index: {}]
  %s3 = inlined_call_operand.hbm [shape: bf16[256,128], index: 3, kind: input, shape index: {}]
  %s4 = inlined_call_operand.vmem [shape: f32[1,128], index: 4, kind: input, shape index: {}]
  %s5 = inlined_call_operand.vmem [shape: f32[1,128], index: 5, kind: input, shape index: {}]
  %s6 = inlined_call_operand.vmem [shape: f32[1,128], index: 6, kind: input, shape index: {}]
  %s7 = inlined_call_operand.hbm [shape: f32[16,128], index: 7, kind: output, shape index: {}]
  %s8 = sld [smem:[#allocation0]]
  $region73: #{tpu_custom_call.1} parent=0
    _
  %s10 = ssub.s32 1, %s8
  %s11 = scalar_select 0, %s10, %s8
  $region1: #{tpu_custom_call.1} parent=0
    #allocation2 [shape = 'u8[8192]{0}', space=vmem, size = 0x2000, scoped, tag = 'input window, operand 0']
    #allocation3 [shape = 's32[2]{0}', space=sflag, size = 0x8, scoped, tag = 'scoped memory for tpu_custom_call.1']
    #allocation4 [shape = 's32[2]{0}', space=sflag, size = 0x8, scoped, tag = 'scoped memory for tpu_custom_call.1']
    #allocation5 [shape = 'u8[65536]{0}', space=vmem, size = 0x10000, scoped, tag = 'input window, operand 1, single buffered']
    #allocation6 [shape = 's32[1]{0}', space=sflag, size = 0x4, scoped, tag = 'scoped memory for tpu_custom_call.1']
    #allocation7 [shape = 'u8[65536]{0}', space=vmem, size = 0x10000, scoped, tag = 'input window, operand 3, single buffered']
    #allocation8 [shape = 'u8[8192]{0}', space=vmem, size = 0x2000, scoped, tag = 'output window, operand 0']
    %12 = vsyncpa [#allocation3], 0
    %s13 = scalar_lea.sflag [#allocation3], 1
    %14 = vsyncpa %s13, 0
    %15 = vsyncpa [#allocation6], 0
    %16 = vsyncpa [#allocation4], 0
    %s17 = scalar_lea.sflag [#allocation4], 1
    %18 = vsyncpa %s17, 0
    loop: start=0, step=1, limit=4
    $region2: #{tpu_custom_call.1} parent=1 // loop_pre_header
      _
    $region3: #{tpu_custom_call.1} parent=1 // loop_header
      %s20 = sphi 0, %s24
      %p21 = scmp.ge.s32.totalorder %s20, 4
      %s30 = sphi 0, %s32
      %s33 = sphi 0, %s30
      %s34 = sphi 0, %s33
      %s50 = sphi 0, %s34
      %s54 = sphi 0, %s54
      %s56 = sphi 0, %s54
      %s57 = sphi 0, %s56
      %s71 = sphi 0, %s57
      %s75 = sphi 0, %s75
      %s77 = sphi 0, %s75
      %s78 = sphi 0, %s77
      %s92 = sphi 0, %s78
      %s96 = sphi 0, %s96
      %s98 = sphi 0, %s96
      %s99 = sphi 0, %s98
      %s113 = sphi 0, %s99
      %s117 = sphi 0, %s117
      %s119 = sphi 0, %s117
      %s120 = sphi 0, %s119
      %s134 = sphi 0, %s120
      %s138 = sphi 0, %s138
      %s140 = sphi 0, %s138
      %s141 = sphi 0, %s140
      %s155 = sphi 0, %s141
      %s159 = sphi 0, %s159
      %s161 = sphi 0, %s159
      %s162 = sphi 0, %s161
      %s176 = sphi 0, %s162
      %s182 = sphi 0, %s184
      %s185 = sphi 0, %s182
      %s186 = sphi 0, %s185
      %s202 = sphi 0, %s186
    $region4: #{tpu_custom_call.1} parent=1 // loop_header_branch
      %23 = sbr.rel (%p21) target = $region8
    $region5: #{tpu_custom_call.1} parent=1 // loop_body
      %s25 = ssub.s32 %s20, 1
      %s26 = ssub.s32 %s20, 2
      %s27 = sadd.s32 %s20, 1
      %s28 = ssub.s32 %s20, %s27
      %p29 = scmp.eq.s32.totalorder %s28, 0
      %s31 = sadd.s32 %s30, 1
      %s32 = scalar_select %p29, %s30, %s31
      %p35 = pneg %p29
      %p36 = scmp.eq.s32.totalorder %s20, 1
      %p37 = por %p35, %p36
      %p38 = scmp.ne.s32.totalorder %s30, %s33
      %p39 = scmp.eq.s32.totalorder %s20, 0
      %p40 = por %p38, %p39
      %p41 = scmp.ne.s32.totalorder %s30, %s33
      %p42 = scmp.eq.s32.totalorder %s25, 1
      %p43 = por %p41, %p42
      %p44 = scmp.ne.s32.totalorder %s33, %s34
      %p45 = scmp.eq.s32.totalorder %s25, 0
      %p46 = por %p44, %p45
      %p47 = scmp.ne.s32.totalorder %s33, %s34
      %p48 = scmp.eq.s32.totalorder %s26, 1
      %p49 = por %p47, %p48
      %p51 = scmp.ne.s32.totalorder %s34, %s50
      %p52 = scmp.eq.s32.totalorder %s26, 0
      %p53 = por %p51, %p52
      %s55 = sadd.s32 %s54, 1
      %p58 = scmp.eq.s32.totalorder %s20, 1
      %p59 = scmp.ne.s32.totalorder %s54, %s56
      %p60 = scmp.eq.s32.totalorder %s20, 0
      %p61 = por %p59, %p60
      %p62 = scmp.ne.s32.totalorder %s54, %s56
      %p63 = scmp.eq.s32.totalorder %s25, 1
      %p64 = por %p62, %p63
      %p65 = scmp.ne.s32.totalorder %s56, %s57
      %p66 = scmp.eq.s32.totalorder %s25, 0
      %p67 = por %p65, %p66
      %p68 = scmp.ne.s32.totalorder %s56, %s57
      %p69 = scmp.eq.s32.totalorder %s26, 1
      %p70 = por %p68, %p69
      %p72 = scmp.ne.s32.totalorder %s57, %s71
      %p73 = scmp.eq.s32.totalorder %s26, 0
      %p74 = por %p72, %p73
      %s76 = sadd.s32 %s75, 1
      %p79 = scmp.eq.s32.totalorder %s20, 1
      %p80 = scmp.ne.s32.totalorder %s75, %s77
      %p81 = scmp.eq.s32.totalorder %s20, 0
      %p82 = por %p80, %p81
      %p83 = scmp.ne.s32.totalorder %s75, %s77
      %p84 = scmp.eq.s32.totalorder %s25, 1
      %p85 = por %p83, %p84
      %p86 = scmp.ne.s32.totalorder %s77, %s78
      %p87 = scmp.eq.s32.totalorder %s25, 0
      %p88 = por %p86, %p87
      %p89 = scmp.ne.s32.totalorder %s77, %s78
      %p90 = scmp.eq.s32.totalorder %s26, 1
      %p91 = por %p89, %p90
      %p93 = scmp.ne.s32.totalorder %s78, %s92
      %p94 = scmp.eq.s32.totalorder %s26, 0
      %p95 = por %p93, %p94
      %s97 = sadd.s32 %s96, 1
      %p100 = scmp.eq.s32.totalorder %s20, 1
      %p101 = scmp.ne.s32.totalorder %s96, %s98
      %p102 = scmp.eq.s32.totalorder %s20, 0
      %p103 = por %p101, %p102
      %p104 = scmp.ne.s32.totalorder %s96, %s98
      %p105 = scmp.eq.s32.totalorder %s25, 1
      %p106 = por %p104, %p105
      %p107 = scmp.ne.s32.totalorder %s98, %s99
      %p108 = scmp.eq.s32.totalorder %s25, 0
      %p109 = por %p107, %p108
      %p110 = scmp.ne.s32.totalorder %s98, %s99
      %p111 = scmp.eq.s32.totalorder %s26, 1
      %p112 = por %p110, %p111
      %p114 = scmp.ne.s32.totalorder %s99, %s113
      %p115 = scmp.eq.s32.totalorder %s26, 0
      %p116 = por %p114, %p115
      %s118 = sadd.s32 %s117, 1
      %p121 = scmp.eq.s32.totalorder %s20, 1
      %p122 = scmp.ne.s32.totalorder %s117, %s119
      %p123 = scmp.eq.s32.totalorder %s20, 0
      %p124 = por %p122, %p123
      %p125 = scmp.ne.s32.totalorder %s117, %s119
      %p126 = scmp.eq.s32.totalorder %s25, 1
      %p127 = por %p125, %p126
      %p128 = scmp.ne.s32.totalorder %s119, %s120
      %p129 = scmp.eq.s32.totalorder %s25, 0
      %p130 = por %p128, %p129
      %p131 = scmp.ne.s32.totalorder %s119, %s120
      %p132 = scmp.eq.s32.totalorder %s26, 1
      %p133 = por %p131, %p132
      %p135 = scmp.ne.s32.totalorder %s120, %s134
      %p136 = scmp.eq.s32.totalorder %s26, 0
      %p137 = por %p135, %p136
      %s139 = sadd.s32 %s138, 1
      %p142 = scmp.eq.s32.totalorder %s20, 1
      %p143 = scmp.ne.s32.totalorder %s138, %s140
      %p144 = scmp.eq.s32.totalorder %s20, 0
      %p145 = por %p143, %p144
      %p146 = scmp.ne.s32.totalorder %s138, %s140
      %p147 = scmp.eq.s32.totalorder %s25, 1
      %p148 = por %p146, %p147
      %p149 = scmp.ne.s32.totalorder %s140, %s141
      %p150 = scmp.eq.s32.totalorder %s25, 0
      %p151 = por %p149, %p150
      %p152 = scmp.ne.s32.totalorder %s140, %s141
      %p153 = scmp.eq.s32.totalorder %s26, 1
      %p154 = por %p152, %p153
      %p156 = scmp.ne.s32.totalorder %s141, %s155
      %p157 = scmp.eq.s32.totalorder %s26, 0
      %p158 = por %p156, %p157
      %s160 = sadd.s32 %s159, 1
      %p163 = scmp.eq.s32.totalorder %s20, 1
      %p164 = scmp.ne.s32.totalorder %s159, %s161
      %p165 = scmp.eq.s32.totalorder %s20, 0
      %p166 = por %p164, %p165
      %p167 = scmp.ne.s32.totalorder %s159, %s161
      %p168 = scmp.eq.s32.totalorder %s25, 1
      %p169 = por %p167, %p168
      %p170 = scmp.ne.s32.totalorder %s161, %s162
      %p171 = scmp.eq.s32.totalorder %s25, 0
      %p172 = por %p170, %p171
      %p173 = scmp.ne.s32.totalorder %s161, %s162
      %p174 = scmp.eq.s32.totalorder %s26, 1
      %p175 = por %p173, %p174
      %p177 = scmp.ne.s32.totalorder %s162, %s176
      %p178 = scmp.eq.s32.totalorder %s26, 0
      %p179 = por %p177, %p178
      %s180 = ssub.s32 %s20, %s27
      %p181 = scmp.eq.s32.totalorder %s180, 0
      %s183 = sadd.s32 %s182, 1
      %s184 = scalar_select %p181, %s182, %s183
      %p187 = pneg %p181
      %p188 = scmp.eq.s32.totalorder %s20, 1
      %p189 = por %p187, %p188
      %p190 = scmp.ne.s32.totalorder %s182, %s185
      %p191 = scmp.eq.s32.totalorder %s20, 0
      %p192 = por %p190, %p191
      %p193 = scmp.ne.s32.totalorder %s182, %s185
      %p194 = scmp.eq.s32.totalorder %s25, 1
      %p195 = por %p193, %p194
      %p196 = scmp.ne.s32.totalorder %s185, %s186
      %p197 = scmp.eq.s32.totalorder %s25, 0
      %p198 = por %p196, %p197
      %p199 = scmp.ne.s32.totalorder %s185, %s186
      %p200 = scmp.eq.s32.totalorder %s26, 1
      %p201 = por %p199, %p200
      %p203 = scmp.ne.s32.totalorder %s186, %s202
      %p204 = scmp.eq.s32.totalorder %s26, 0
      %p205 = por %p203, %p204
      %p206 = scmp.le.s32.totalorder 1, %s20
      %p207 = scmp.lt.s32.totalorder %s20, 3
      %p208 = pnand %p206, %p207
      %p209 = pneg %p208
      // Predicated region
      $region9: #{tpu_custom_call.1} parent=5 // pred_check
        _
      $region10: #{tpu_custom_call.1} parent=5 // pred_check_branch
        %211 = sbr.rel (%p208) target = $region12
      $region11: #{tpu_custom_call.1} parent=5 // pred_region
        %s212 = ssub.s32 %s20, 1
        // Predicated region
        $region13: #{tpu_custom_call.1} parent=11 // pred_check
          %p213 = pneg %p67
        $region14: #{tpu_custom_call.1} parent=11 // pred_check_branch
          %215 = sbr.rel (%p213) target = $region16
        $region15: #{tpu_custom_call.1} parent=11 // pred_region
          %s217 = ssub.s32 2048, 2048
          %218 = vsyncadd [#allocation6], %s217
          %s219 = sshll.u32 [#allocation5], 4
          %s220 = int_to_ptr.vmem [resolvable:$true] %s219
          %225 = dma.hbm_to_vmem [thread:$0]  %s1, 2048, %s220, [#allocation6], 128, 128, 8
        $region16: #{tpu_custom_call.1} parent=11 // pred_fallthru
          _
        // Predicated region
        $region17: #{tpu_custom_call.1} parent=11 // pred_check
          %p226 = pneg %p88
        $region18: #{tpu_custom_call.1} parent=11 // pred_check_branch
          %228 = sbr.rel (%p226) target = $region20
        $region19: #{tpu_custom_call.1} parent=11 // pred_region
          _
        $region20: #{tpu_custom_call.1} parent=11 // pred_fallthru
          _
        // Predicated region
        $region21: #{tpu_custom_call.1} parent=11 // pred_check
          %p229 = pneg %p109
        $region22: #{tpu_custom_call.1} parent=11 // pred_check_branch
          %231 = sbr.rel (%p229) target = $region24
        $region23: #{tpu_custom_call.1} parent=11 // pred_region
          %s233 = ssub.s32 2048, 2048
          %234 = vsyncadd [#allocation6], %s233
          %s235 = sshll.u32 [#allocation7], 4
          %s236 = int_to_ptr.vmem [resolvable:$true] %s235
          %241 = dma.hbm_to_vmem [thread:$0]  %s3, 2048, %s236, [#allocation6], 64, 64, 4
        $region24: #{tpu_custom_call.1} parent=11 // pred_fallthru
          _
        // Predicated region
        $region25: #{tpu_custom_call.1} parent=11 // pred_check
          %p242 = pneg %p130
        $region26: #{tpu_custom_call.1} parent=11 // pred_check_branch
          %244 = sbr.rel (%p242) target = $region28
        $region27: #{tpu_custom_call.1} parent=11 // pred_region
          _
        $region28: #{tpu_custom_call.1} parent=11 // pred_fallthru
          _
        // Predicated region
        $region29: #{tpu_custom_call.1} parent=11 // pred_check
          %p245 = pneg %p151
        $region30: #{tpu_custom_call.1} parent=11 // pred_check_branch
          %247 = sbr.rel (%p245) target = $region32
        $region31: #{tpu_custom_call.1} parent=11 // pred_region
          _
        $region32: #{tpu_custom_call.1} parent=11 // pred_fallthru
          _
        // Predicated region
        $region33: #{tpu_custom_call.1} parent=11 // pred_check
          %p248 = pneg %p172
        $region34: #{tpu_custom_call.1} parent=11 // pred_check_branch
          %250 = sbr.rel (%p248) target = $region36
        $region35: #{tpu_custom_call.1} parent=11 // pred_region
          _
        $region36: #{tpu_custom_call.1} parent=11 // pred_fallthru
          _
      $region12: #{tpu_custom_call.1} parent=5 // pred_fallthru
        _
      %p251 = scmp.lt.s32.totalorder %s20, 2
      // Predicated region
      $region37: #{tpu_custom_call.1} parent=5 // pred_check
        %p252 = pneg %p251
      $region38: #{tpu_custom_call.1} parent=5 // pred_check_branch
        %254 = sbr.rel (%p252) target = $region40
      $region39: #{tpu_custom_call.1} parent=5 // pred_region
        // Predicated region
        $region41: #{tpu_custom_call.1} parent=39 // pred_check
          %p255 = pneg %p40
        $region42: #{tpu_custom_call.1} parent=39 // pred_check_branch
          %257 = sbr.rel (%p255) target = $region44
        $region43: #{tpu_custom_call.1} parent=39 // pred_region
          %s258 = sand.u32 %s30, 1
          %s259 = scalar_lea.sflag [#allocation3], %s258
          %s260 = sand.u32 %s30, 1
          %s261 = smul.addr %s260, 8
          %s262 = scalar_lea.vmem [#allocation2], %s261
          %s264 = ssub.s32 128, 128
          %265 = vsyncadd %s259, %s264
          %s266 = smul.addr %s20, 128
          %s267 = scalar_lea.hbm %s0, %s266
          %s269 = sshll.u32 %s262, 4
          %s270 = int_to_ptr.vmem [resolvable:$true] %s269
          %272 = dma.hbm_to_vmem [thread:$0]  %s267, 128, %s270, %s259
        $region44: #{tpu_custom_call.1} parent=39 // pred_fallthru
          _
      $region40: #{tpu_custom_call.1} parent=5 // pred_fallthru
        _
      %p273 = scmp.le.s32.totalorder 1, %s20
      %p274 = scmp.lt.s32.totalorder %s20, 3
      %p275 = pnand %p273, %p274
      %p276 = pneg %p275
      // Predicated region
      $region45: #{tpu_custom_call.1} parent=5 // pred_check
        _
      $region46: #{tpu_custom_call.1} parent=5 // pred_check_branch
        %278 = sbr.rel (%p275) target = $region48
      $region47: #{tpu_custom_call.1} parent=5 // pred_region
        %s279 = ssub.s32 %s20, 1
        %s280 = sand.u32 %s33, 1
        %s281 = scalar_lea.sflag [#allocation3], %s280
        %s282 = sand.u32 %s33, 1
        %s283 = smul.addr %s282, 8
        %s284 = scalar_lea.vmem [#allocation2], %s283
        // Predicated region
        $region49: #{tpu_custom_call.1} parent=47 // pred_check
          %p285 = pneg %p46
        $region50: #{tpu_custom_call.1} parent=47 // pred_check_branch
          %287 = sbr.rel (%p285) target = $region52
        $region51: #{tpu_custom_call.1} parent=47 // pred_region
          %288 = dma.done %s281, 128
        $region52: #{tpu_custom_call.1} parent=47 // pred_fallthru
          _
        // Predicated region
        $region53: #{tpu_custom_call.1} parent=47 // pred_check
          %p289 = pneg %p67
        $region54: #{tpu_custom_call.1} parent=47 // pred_check_branch
          %291 = sbr.rel (%p289) target = $region56
        $region55: #{tpu_custom_call.1} parent=47 // pred_region
          %292 = dma.done [#allocation6], 2048
        $region56: #{tpu_custom_call.1} parent=47 // pred_fallthru
          _
        // Predicated region
        $region57: #{tpu_custom_call.1} parent=47 // pred_check
          %p293 = pneg %p109
        $region58: #{tpu_custom_call.1} parent=47 // pred_check_branch
          %295 = sbr.rel (%p293) target = $region60
        $region59: #{tpu_custom_call.1} parent=47 // pred_region
          %296 = dma.done [#allocation6], 2048
        $region60: #{tpu_custom_call.1} parent=47 // pred_fallthru
          _
        %s297 = sand.u32 %s33, 1
        %s298 = scalar_lea.sflag [#allocation3], %s297
        %s299 = sand.u32 %s33, 1
        %s300 = smul.addr %s299, 8
        %s301 = scalar_lea.vmem [#allocation2], %s300
        %p302 = pneg %p46
        %p303 = pneg %p43
        %p304 = pneg %p67
        %p305 = pneg %p64
        %p306 = pneg %p88
        %p307 = pneg %p85
        %p308 = pneg %p109
        %p309 = pneg %p106
        %p310 = pneg %p130
        %p311 = pneg %p127
        %p312 = pneg %p151
        %p313 = pneg %p148
        %p314 = pneg %p172
        %p315 = pneg %p169
        %p316 = pneg %p198
        %p317 = pneg %p195
        %s318 = sand.u32 %s185, 1
        %s319 = scalar_lea.sflag [#allocation4], %s318
        %s320 = sand.u32 %s185, 1
        %s321 = smul.addr %s320, 8
        %s322 = scalar_lea.vmem [#allocation8], %s321
        %v324 = vld [vmem:[%s284] sm:$0xff]
        %v325 = vpack.c.bf16 %v324, %v324
        %v326 = vld [vmem:[#allocation5] sm:$0xff]
        %v327 = vld [vmem:[#allocation5 + $0x8] sm:$0xff]
        %v328 = vld [vmem:[#allocation5 + $0x10] sm:$0xff]
        %v329 = vld [vmem:[#allocation5 + $0x18] sm:$0xff]
        %v330 = vld [vmem:[#allocation5 + $0x20] sm:$0xff]
        %v331 = vld [vmem:[#allocation5 + $0x28] sm:$0xff]
        %v332 = vld [vmem:[#allocation5 + $0x30] sm:$0xff]
        %v333 = vld [vmem:[#allocation5 + $0x38] sm:$0xff]
        %v334 = vld [vmem:[#allocation5 + $0x40] sm:$0xff]
        %v335 = vld [vmem:[#allocation5 + $0x48] sm:$0xff]
        %v336 = vld [vmem:[#allocation5 + $0x50] sm:$0xff]
        %v337 = vld [vmem:[#allocation5 + $0x58] sm:$0xff]
        %v338 = vld [vmem:[#allocation5 + $0x60] sm:$0xff]
        %v339 = vld [vmem:[#allocation5 + $0x68] sm:$0xff]
        %v340 = vld [vmem:[#allocation5 + $0x70] sm:$0xff]
        %v341 = vld [vmem:[#allocation5 + $0x78] sm:$0xff]
        %v342 = vld [vmem:[%s2] sm:$0x3]
        %v344 = vlaneseq
        %v345 = vshrl.u32 %v344, 7
        %v346 = vsub.s32 0, %v345
        %v347 = vrot.slane %v342, %v346
        %v348 = vlaneseq
        %v349 = vshrl.u32 %v348, 7
        %v350 = vsub.s32 1, %v349
        %v351 = vrot.slane %v342, %v350
        %v370 = vunpack.c.l.b16 %v326
        %v371 = vunpack.c.h.b16 %v326
        %v372 = vunpack.c.l.b16 %v327
        %v373 = vunpack.c.h.b16 %v327
        %v374 = vunpack.c.l.b16 %v328
        %v375 = vunpack.c.h.b16 %v328
        %v376 = vunpack.c.l.b16 %v329
        %v377 = vunpack.c.h.b16 %v329
        %v378 = vunpack.c.l.b16 %v330
        %v379 = vunpack.c.h.b16 %v330
        %v380 = vunpack.c.l.b16 %v331
        %v381 = vunpack.c.h.b16 %v331
        %v382 = vunpack.c.l.b16 %v332
        %v383 = vunpack.c.h.b16 %v332
        %v384 = vunpack.c.l.b16 %v333
        %v385 = vunpack.c.h.b16 %v333
        %v386 = vunpack.c.l.b16 %v334
        %v387 = vunpack.c.h.b16 %v334
        %v388 = vunpack.c.l.b16 %v335
        %v389 = vunpack.c.h.b16 %v335
        %v390 = vunpack.c.l.b16 %v336
        %v391 = vunpack.c.h.b16 %v336
        %v392 = vunpack.c.l.b16 %v337
        %v393 = vunpack.c.h.b16 %v337
        %v394 = vunpack.c.l.b16 %v338
        %v395 = vunpack.c.h.b16 %v338
        %v396 = vunpack.c.l.b16 %v339
        %v397 = vunpack.c.h.b16 %v339
        %v398 = vunpack.c.l.b16 %v340
        %v399 = vunpack.c.h.b16 %v340
        %v400 = vunpack.c.l.b16 %v341
        %v401 = vunpack.c.h.b16 %v341
        %v402 = vpack.c.b16 %v372, %v370
        %v403 = vpack.c.b16 %v373, %v371
        %v404 = vpack.c.b16 %v376, %v374
        %v405 = vpack.c.b16 %v377, %v375
        %v406 = vpack.c.b16 %v380, %v378
        %v407 = vpack.c.b16 %v381, %v379
        %v408 = vpack.c.b16 %v384, %v382
        %v409 = vpack.c.b16 %v385, %v383
        %v410 = vpack.c.b16 %v388, %v386
        %v411 = vpack.c.b16 %v389, %v387
        %v412 = vpack.c.b16 %v392, %v390
        %v413 = vpack.c.b16 %v393, %v391
        %v414 = vpack.c.b16 %v396, %v394
        %v415 = vpack.c.b16 %v397, %v395
        %v416 = vpack.c.b16 %v400, %v398
        %v417 = vpack.c.b16 %v401, %v399
        %434 = vmatprep.subr.bf16.mxu0 %v417
        %435 = vmatpush1.bf16.msra.mxu0 %v416
        %436 = vmatprep.subr.bf16.mxu0 %v415
        %437 = vmatpush1.bf16.msra.mxu0 %v414
        %438 = vmatprep.subr.bf16.mxu0 %v413
        %439 = vmatpush1.bf16.msra.mxu0 %v412
        %440 = vmatprep.subr.bf16.mxu0 %v411
        %441 = vmatpush1.bf16.msra.mxu0 %v410
        %442 = vmatprep.subr.bf16.mxu0 %v409
        %443 = vmatpush1.bf16.msra.mxu0 %v408
        %444 = vmatprep.subr.bf16.mxu0 %v407
        %445 = vmatpush1.bf16.msra.mxu0 %v406
        %446 = vmatprep.subr.bf16.mxu0 %v405
        %447 = vmatpush1.bf16.msra.mxu0 %v404
        %448 = vmatprep.subr.bf16.mxu0 %v403
        %449 = vmatpush1.bf16.msra.mxu0 %v402
        %450 = vmatprep.subr.bf16.mxu0 0
        %451 = vmatpush2.bf16.msra.mxu0 0
        %452 = vmatprep.subr.bf16.mxu0 0
        %453 = vmatpush2.bf16.msra.mxu0 0
        %454 = vmatprep.subr.bf16.mxu0 0
        %455 = vmatpush2.bf16.msra.mxu0 0
        %456 = vmatprep.subr.bf16.mxu0 0
        %457 = vmatpush2.bf16.msra.mxu0 0
        %458 = vmatprep.subr.bf16.mxu0 0
        %459 = vmatpush2.bf16.msra.mxu0 0
        %460 = vmatprep.subr.bf16.mxu0 0
        %461 = vmatpush2.bf16.msra.mxu0 0
        %462 = vmatprep.subr.bf16.mxu0 0
        %463 = vmatpush2.bf16.msra.mxu0 0
        %464 = vmatprep.subr.bf16.mxu0 0
        %465 = vmatpush2.bf16.msra.mxu0 0
        %466 = vmatprep.mubr.bf16.mxu0 0
        %467 = vmatmul.mubr.bf16.gmra.mxu0 %v325
        %v468 = vpop.f32.mrf.mxu0
        %v469 = vadd.f32 %v347, %v468
        %v470 = vpop.f32.mrf.mxu0
        %v471 = vadd.f32 %v351, %v470
        %v472 = vpop.f32.mrf.mxu0
        %v473 = vpop.f32.mrf.mxu0
        %474 = vdwg.mxu0
        %v475 = vmax.f32 %v469, 0.0
        %v476 = vmax.f32 %v471, 0.0
        %v477 = vpack.c.bf16 %v475, %v475
        %v478 = vpack.c.bf16 %v476, %v476
        %v479 = vld [vmem:[#allocation7] sm:$0xf]
        %v480 = vld [vmem:[#allocation7 + $0x4] sm:$0xf]
        %v481 = vld [vmem:[#allocation7 + $0x8] sm:$0xf]
        %v482 = vld [vmem:[#allocation7 + $0xc] sm:$0xf]
        %v483 = vld [vmem:[#allocation7 + $0x10] sm:$0xf]
        %v484 = vld [vmem:[#allocation7 + $0x14] sm:$0xf]
        %v485 = vld [vmem:[#allocation7 + $0x18] sm:$0xf]
        %v486 = vld [vmem:[#allocation7 + $0x1c] sm:$0xf]
        %v487 = vld [vmem:[#allocation7 + $0x20] sm:$0xf]
        %v488 = vld [vmem:[#allocation7 + $0x24] sm:$0xf]
        %v489 = vld [vmem:[#allocation7 + $0x28] sm:$0xf]
        %v490 = vld [vmem:[#allocation7 + $0x2c] sm:$0xf]
        %v491 = vld [vmem:[#allocation7 + $0x30] sm:$0xf]
        %v492 = vld [vmem:[#allocation7 + $0x34] sm:$0xf]
        %v493 = vld [vmem:[#allocation7 + $0x38] sm:$0xf]
        %v494 = vld [vmem:[#allocation7 + $0x3c] sm:$0xf]
        %v495 = vld [vmem:[#allocation7 + $0x40] sm:$0xf]
        %v496 = vld [vmem:[#allocation7 + $0x44] sm:$0xf]
        %v497 = vld [vmem:[#allocation7 + $0x48] sm:$0xf]
        %v498 = vld [vmem:[#allocation7 + $0x4c] sm:$0xf]
        %v499 = vld [vmem:[#allocation7 + $0x50] sm:$0xf]
        %v500 = vld [vmem:[#allocation7 + $0x54] sm:$0xf]
        %v501 = vld [vmem:[#allocation7 + $0x58] sm:$0xf]
        %v502 = vld [vmem:[#allocation7 + $0x5c] sm:$0xf]
        %v503 = vld [vmem:[#allocation7 + $0x60] sm:$0xf]
        %v504 = vld [vmem:[#allocation7 + $0x64] sm:$0xf]
        %v505 = vld [vmem:[#allocation7 + $0x68] sm:$0xf]
        %v506 = vld [vmem:[#allocation7 + $0x6c] sm:$0xf]
        %v507 = vld [vmem:[#allocation7 + $0x70] sm:$0xf]
        %v508 = vld [vmem:[#allocation7 + $0x74] sm:$0xf]
        %v509 = vld [vmem:[#allocation7 + $0x78] sm:$0xf]
        %v510 = vld [vmem:[#allocation7 + $0x7c] sm:$0xf]
        %v543 = vunpack.c.l.b16 %v479
        %v544 = vunpack.c.l.b16 %v480
        %v545 = vunpack.c.l.b16 %v481
        %v546 = vunpack.c.l.b16 %v482
        %v547 = vunpack.c.l.b16 %v483
        %v548 = vunpack.c.l.b16 %v484
        %v549 = vunpack.c.l.b16 %v485
        %v550 = vunpack.c.l.b16 %v486
        %v551 = vunpack.c.l.b16 %v487
        %v552 = vunpack.c.l.b16 %v488
        %v553 = vunpack.c.l.b16 %v489
        %v554 = vunpack.c.l.b16 %v490
        %v555 = vunpack.c.l.b16 %v491
        %v556 = vunpack.c.l.b16 %v492
        %v557 = vunpack.c.l.b16 %v493
        %v558 = vunpack.c.l.b16 %v494
        %v559 = vunpack.c.l.b16 %v495
        %v560 = vunpack.c.l.b16 %v496
        %v561 = vunpack.c.l.b16 %v497
        %v562 = vunpack.c.l.b16 %v498
        %v563 = vunpack.c.l.b16 %v499
        %v564 = vunpack.c.l.b16 %v500
        %v565 = vunpack.c.l.b16 %v501
        %v566 = vunpack.c.l.b16 %v502
        %v567 = vunpack.c.l.b16 %v503
        %v568 = vunpack.c.l.b16 %v504
        %v569 = vunpack.c.l.b16 %v505
        %v570 = vunpack.c.l.b16 %v506
        %v571 = vunpack.c.l.b16 %v507
        %v572 = vunpack.c.l.b16 %v508
        %v573 = vunpack.c.l.b16 %v509
        %v574 = vunpack.c.l.b16 %v510
        %v575 = vpack.c.b16 %v544, %v543
        %v576 = vpack.c.b16 %v546, %v545
        %v577 = vpack.c.b16 %v548, %v547
        %v578 = vpack.c.b16 %v550, %v549
        %v579 = vpack.c.b16 %v552, %v551
        %v580 = vpack.c.b16 %v554, %v553
        %v581 = vpack.c.b16 %v556, %v555
        %v582 = vpack.c.b16 %v558, %v557
        %v583 = vpack.c.b16 %v560, %v559
        %v584 = vpack.c.b16 %v562, %v561
        %v585 = vpack.c.b16 %v564, %v563
        %v586 = vpack.c.b16 %v566, %v565
        %v587 = vpack.c.b16 %v568, %v567
        %v588 = vpack.c.b16 %v570, %v569
        %v589 = vpack.c.b16 %v572, %v571
        %v590 = vpack.c.b16 %v574, %v573
        %607 = vmatprep.subr.bf16.mxu0 0
        %608 = vmatpush1.bf16.msra.mxu0 %v582
        %609 = vmatprep.subr.bf16.mxu0 0
        %610 = vmatpush1.bf16.msra.mxu0 %v581
        %611 = vmatprep.subr.bf16.mxu0 0
        %612 = vmatpush1.bf16.msra.mxu0 %v580
        %613 = vmatprep.subr.bf16.mxu0 0
        %614 = vmatpush1.bf16.msra.mxu0 %v579
        %615 = vmatprep.subr.bf16.mxu0 0
        %616 = vmatpush1.bf16.msra.mxu0 %v578
        %617 = vmatprep.subr.bf16.mxu0 0
        %618 = vmatpush1.bf16.msra.mxu0 %v577
        %619 = vmatprep.subr.bf16.mxu0 0
        %620 = vmatpush1.bf16.msra.mxu0 %v576
        %621 = vmatprep.subr.bf16.mxu0 0
        %622 = vmatpush1.bf16.msra.mxu0 %v575
        %623 = vmatprep.subr.bf16.mxu0 0
        %624 = vmatpush2.bf16.msra.mxu0 %v590
        %625 = vmatprep.subr.bf16.mxu0 0
        %626 = vmatpush2.bf16.msra.mxu0 %v589
        %627 = vmatprep.subr.bf16.mxu0 0
        %628 = vmatpush2.bf16.msra.mxu0 %v588
        %629 = vmatprep.subr.bf16.mxu0 0
        %630 = vmatpush2.bf16.msra.mxu0 %v587
        %631 = vmatprep.subr.bf16.mxu0 0
        %632 = vmatpush2.bf16.msra.mxu0 %v586
        %633 = vmatprep.subr.bf16.mxu0 0
        %634 = vmatpush2.bf16.msra.mxu0 %v585
        %635 = vmatprep.subr.bf16.mxu0 0
        %636 = vmatpush2.bf16.msra.mxu0 %v584
        %637 = vmatprep.subr.bf16.mxu0 0
        %638 = vmatpush2.bf16.msra.mxu0 %v583
        %639 = vmatprep.mubr.bf16.mxu0 %v478
        %640 = vmatmul.mubr.bf16.gmra.mxu0 %v477
        %v641 = vpop.f32.mrf.mxu0
        %v642 = vadd.f32 0.0, %v641
        %v643 = vpop.f32.mrf.mxu0
        %v644 = vpop.f32.mrf.mxu0
        %v645 = vpop.f32.mrf.mxu0
        %646 = vdwg.mxu0
        %v647 = vadd.f32 %v324, %v642
        %v648 = vld [vmem:[%s4] sm:$0x1]
        %v650 = vlaneseq
        %v651 = vshrl.u32 %v650, 7
        %v652 = vsub.s32 0, %v651
        %v653 = vrot.slane %v648, %v652
        %v655 = vadd.f32 %v647, %v653
        %v656 = vld [vmem:[%s5] sm:$0x1]
        %v657 = vld [vmem:[%s6] sm:$0x1]
        %658 = vadd.xlane.f32.xlu0 %v655
        %v659 = vpop.xlane.xlu0 %658
        %v660 = vrcp.pop 128.0
        %v661 = vmul.f32 %v659, %v660
        %v662 = vsub.f32 %v655, %v661
        %v663 = vmul.f32 %v662, %v662
        %664 = vadd.xlane.f32.xlu0 %v663
        %v665 = vpop.xlane.xlu0 %664
        %v666 = vmul.f32 %v665, %v660
        %v667 = vadd.f32 %v666, 1e-05
        %v668 = vrsqrt.pop %v667
        %v669 = vmul.f32 %v662, %v668
        %v671 = vlaneseq
        %v672 = vshrl.u32 %v671, 7
        %v673 = vsub.s32 0, %v672
        %v674 = vrot.slane %v656, %v673
        %v676 = vmul.f32 %v669, %v674
        %v678 = vlaneseq
        %v679 = vshrl.u32 %v678, 7
        %v680 = vsub.s32 0, %v679
        %v681 = vrot.slane %v657, %v680
        %v683 = vadd.f32 %v676, %v681
        %684 = vst [vmem:[%s322] sm:$0xff] %v683
        %s685 = sand.u32 %s185, 1
        %s686 = scalar_lea.sflag [#allocation4], %s685
        %s687 = sand.u32 %s185, 1
        %s688 = smul.addr %s687, 8
        %s689 = scalar_lea.vmem [#allocation8], %s688
        // Predicated region
        $region61: #{tpu_custom_call.1} parent=47 // pred_check
          %p690 = pneg %p195
        $region62: #{tpu_custom_call.1} parent=47 // pred_check_branch
          %692 = sbr.rel (%p690) target = $region64
        $region63: #{tpu_custom_call.1} parent=47 // pred_region
          %s694 = ssub.s32 128, 128
          %695 = vsyncadd %s686, %s694
          %s696 = smul.addr %s25, 128
          %s697 = scalar_lea.hbm %s7, %s696
          %s699 = sshll.u32 %s689, 4
          %s700 = int_to_ptr.vmem [resolvable:$true] %s699
          %702 = dma.vmem_to_hbm [thread:$0]  %s700, 128, %s697, %s686
        $region64: #{tpu_custom_call.1} parent=47 // pred_fallthru
          _
      $region48: #{tpu_custom_call.1} parent=5 // pred_fallthru
        _
      %p703 = scmp.le.s32.totalorder 2, %s20
      // Predicated region
      $region65: #{tpu_custom_call.1} parent=5 // pred_check
        %p704 = pneg %p703
      $region66: #{tpu_custom_call.1} parent=5 // pred_check_branch
        %706 = sbr.rel (%p704) target = $region68
      $region67: #{tpu_custom_call.1} parent=5 // pred_region
        %s707 = ssub.s32 %s20, 2
        // Predicated region
        $region69: #{tpu_custom_call.1} parent=67 // pred_check
          %p708 = pneg %p201
        $region70: #{tpu_custom_call.1} parent=67 // pred_check_branch
          %710 = sbr.rel (%p708) target = $region72
        $region71: #{tpu_custom_call.1} parent=67 // pred_region
          %s711 = sand.u32 %s186, 1
          %s712 = scalar_lea.sflag [#allocation4], %s711
          %s713 = sand.u32 %s186, 1
          %s714 = smul.addr %s713, 8
          %s715 = scalar_lea.vmem [#allocation8], %s714
          %716 = dma.done %s712, 128
        $region72: #{tpu_custom_call.1} parent=67 // pred_fallthru
          _
      $region68: #{tpu_custom_call.1} parent=5 // pred_fallthru
        _
    $region6: #{tpu_custom_call.1} parent=1 // loop_footer
      %s24 = sadd.s32 1, %s20
    $region7: #{tpu_custom_call.1} parent=1 // loop_footer_branch
      %19 = sbr.rel target = $region3
    $region8: #{tpu_custom_call.1} parent=1 // loop_exit
      _
    %717 = vsyncpa [#allocation3], 1
    %s718 = scalar_lea.sflag [#allocation3], 1
    %719 = vsyncpa %s718, 1
    %720 = vsyncpa [#allocation6], 1
    %721 = vsyncpa [#allocation4], 1
    %s722 = scalar_lea.sflag [#allocation4], 1
    %723 = vsyncpa %s722, 1

</llo_original>
